<compile_context>
chip_gen: v7x
topology: tpu7x:2x2x1
jax: 0.10.0
libtpu: 0.0.40
codegen_flags: <defaults>
</compile_context>

<pallas_src>
from functools import partial

import jax
import jax.numpy as jnp
from jax import lax
from jax.experimental import pallas as pl
from jax.experimental.pallas import tpu as pltpu

_NEG_BIG = -3.0e38  # effectively -inf for f32 softmax masking


def _attention_kernel(enc_ref, att2_ref, we_ref, wf_ref, awe_ref, alpha_ref,
                      *, p_valid):
    # enc_ref:  (BT, P, E)   att2_ref: (BT, A)  (decoder proj + both biases)
    # we_ref:   (E, A)       wf_ref:   (1, A)
    # awe_ref:  (BT, E)      alpha_ref:(BT, P)
    bt, p, e = enc_ref.shape
    a = we_ref.shape[1]

    enc = enc_ref[...]                                           # (BT, P, E)

    # Encoder projection as one big MXU matmul over all BT*P rows.
    att1 = jnp.dot(enc.reshape(bt * p, e), we_ref[...],
                   preferred_element_type=jnp.float32).reshape(bt, p, a)

    # tanh(att1 + att2); att2 already includes be + bd. Broadcast over P (VPU).
    t = jnp.tanh(att1 + att2_ref[...][:, None, :])               # (BT, P, A)

    # full_att contraction over A (lane reduce). The full_att bias bf is a
    # uniform pre-softmax shift -> softmax no-op, so it is omitted.
    scores = jnp.sum(t * wf_ref[...], axis=-1)                   # (BT, P)

    if p_valid is not None and p_valid < p:
        pix = lax.broadcasted_iota(jnp.int32, (1, p), 1)
        scores = jnp.where(pix < p_valid, scores, _NEG_BIG)

    # Softmax over the pixel (lane) axis.
    m = jnp.max(scores, axis=-1, keepdims=True)                  # (BT, 1)
    ex = jnp.exp(scores - m)                                     # (BT, P)
    denom = jnp.sum(ex, axis=-1, keepdims=True)                  # (BT, 1)
    inv = pl.reciprocal(denom, approx=True)                      # EUP path
    inv = inv * (2.0 - denom * inv)                              # Newton -> ~f32 exact
    alpha = ex * inv                                             # (BT, P)

    # Attention-weighted encoding: VPU broadcast-mul + sublane reduce over P.
    # (Keeps the MXU free for the next block's projection; padded pixels have
    #  alpha == 0 and zero enc rows, so they contribute nothing.)
    awe = jnp.sum(enc.astype(jnp.float32) * alpha[:, :, None], axis=1)  # (BT, E)

    awe_ref[...] = awe.astype(awe_ref.dtype)
    alpha_ref[...] = alpha.astype(alpha_ref.dtype)


def _vmem_budgets():
    """Generation-aware (block_budget, vmem_limit) in bytes."""
    try:
        info = pltpu.get_tpu_info()
        cap = getattr(info, "vmem_capacity_bytes", None) or (64 << 20)
    except Exception:  # no TPU info available -> conservative (v7x-safe)
        cap = 64 << 20
    block_budget = int(cap * 0.40)                       # ~51 MiB v5e/v6e, ~25 MiB v7x
    vmem_limit = max(32 << 20, min(int(cap * 0.75), cap - (16 << 20)))
    return block_budget, vmem_limit


def _choose_block_b(B, P, E, A, enc_itemsize, block_budget):
    """Largest valid batch tile fitting the budget.

    Valid tiles are multiples of 8 (2-D output blocks' (8,128) rule) or B
    itself; prefers an even grid of >= 4 steps (v7x has 2 TensorCores).
    """
    def vmem_cost(bt):
        enc_blk = bt * P * E * enc_itemsize
        io = 2 * (enc_blk + bt * (A + E + P) * 4)        # double-buffered in/out blocks
        weights = 2 * (E * A * enc_itemsize + A * 4)     # We / wf buffers
        live = bt * P * A * 4 * 2 + bt * P * E * 4       # att1/tanh + f32 weighted-enc temp
        return io + weights + live

    cands = [d for d in range(8, B + 1, 8) if B % d == 0]
    if B not in cands:
        cands.append(B)
    fitting = [d for d in cands if vmem_cost(d) <= block_budget]
    if not fitting:
        return min(cands)
    good = [d for d in fitting if (B // d) >= 4 and (B // d) % 2 == 0]
    return max(good) if good else max(fitting)


def attention_pallas(encoder_out, decoder_hidden, params, *,
                     block_b=None, input_dtype=None):
    """encoder_out: (B, P, E); decoder_hidden: (B, D). Returns (awe (B,E), alpha (B,P))."""
    B, P, E = encoder_out.shape
    A = params["we"].shape[1]

    # Decoder linear + both additive biases hoisted to one batched XLA matmul.
    att2 = (decoder_hidden @ params["wd"] + params["bd"] + params["be"])
    att2 = att2.astype(jnp.float32)                               # (B, A)

    enc = encoder_out
    we = params["we"]
    if input_dtype is not None:                  # e.g. jnp.bfloat16 halves HBM traffic
        enc = enc.astype(input_dtype)
        we = we.astype(input_dtype)
    wf = params["wf"].reshape(1, A).astype(jnp.float32)
    # params["bf"] intentionally unused: uniform pre-softmax shift == no-op.

    itemsize = jnp.dtype(enc.dtype).itemsize
    sub = 16 if itemsize == 2 else 8             # sublane pack for enc dtype
    P_pad = ((P + sub - 1) // sub) * sub
    if P_pad != P:
        enc = jnp.pad(enc, ((0, 0), (0, P_pad - P), (0, 0)))

    block_budget, vmem_limit = _vmem_budgets()
    if block_b is None:
        block_b = _choose_block_b(B, P_pad, E, A, itemsize, block_budget)
    assert B % block_b == 0, "block_b must divide the batch size"
    assert block_b % 8 == 0 or block_b == B, \
        "2-D output blocks require block_b % 8 == 0 (or block_b == B)"
    grid = (B // block_b,)

    kernel = partial(_attention_kernel, p_valid=P if P_pad != P else None)

    # TODO(synk): for v6e/v7x with small attention_dim, pad A (We/wf/att2 zero
    # columns) to a multiple of 256 to light up the full 2x256 MXU.
    awe, alpha = pl.pallas_call(
        kernel,
        out_shape=(
            jax.ShapeDtypeStruct((B, E), jnp.float32),
            jax.ShapeDtypeStruct((B, P_pad), jnp.float32),
        ),
        grid=grid,
        in_specs=[
            pl.BlockSpec((block_b, P_pad, E), lambda b: (b, 0, 0)),  # encoder_out
            pl.BlockSpec((block_b, A), lambda b: (b, 0)),            # att2 (+ biases)
            pl.BlockSpec((E, A), lambda b: (0, 0)),                  # W_enc
            pl.BlockSpec((1, A), lambda b: (0, 0)),                  # W_full (row vector)
        ],
        out_specs=(
            pl.BlockSpec((block_b, E), lambda b: (b, 0)),            # awe, lane-dense in E
            pl.BlockSpec((block_b, P_pad), lambda b: (b, 0)),        # alpha, lane-dense in P
        ),
        compiler_params=pltpu.CompilerParams(
            dimension_semantics=("parallel",),
            vmem_limit_bytes=vmem_limit,
        ),
    )(enc, att2, we, wf)

    if P_pad != P:
        alpha = alpha[:, :P]
    return awe, alpha


def attention_reference(encoder_out, decoder_hidden, params):
    """Pure-JAX reference mirroring the PyTorch forward."""
    att1 = encoder_out @ params["we"] + params["be"]               # (B, P, A)
    att2 = decoder_hidden @ params["wd"] + params["bd"]            # (B, A)
    att = jnp.tanh(att1 + att2[:, None, :]) @ params["wf"].reshape(-1, 1)
    att = att[..., 0] + params["bf"]                               # (B, P)
    alpha = jax.nn.softmax(att, axis=1)
    awe = jnp.sum(encoder_out * alpha[..., None], axis=1)
    return awe, alpha


def init_params(key, encoder_dim, decoder_dim, attention_dim):
    """Deterministic init. Weights stored as (in, out); torch nn.Linear-style bound."""
    ks = jax.random.split(key, 6)

    def lin(kw, kb, fan_in, fan_out):
        bound = 1.0 / jnp.sqrt(fan_in)
        w = jax.random.uniform(kw, (fan_in, fan_out), jnp.float32, -bound, bound)
        b = jax.random.uniform(kb, (fan_out,), jnp.float32, -bound, bound)
        return w, b

    we, be = lin(ks[0], ks[1], encoder_dim, attention_dim)
    wd, bd = lin(ks[2], ks[3], decoder_dim, attention_dim)
    wf, bf = lin(ks[4], ks[5], attention_dim, 1)
    return {"we": we, "be": be, "wd": wd, "bd": bd,
            "wf": wf.reshape(-1), "bf": bf.reshape(())}


if __name__ == "__main__":
    B, P = 2, 16            # batch, num_pixels (e.g. 4x4 feature map)
    E, D, A = 32, 32, 32    # encoder_dim, decoder_dim, attention_dim

    key = jax.random.PRNGKey(0)
    k_enc, k_dec, k_par = jax.random.split(key, 3)

    encoder_out = jax.random.normal(k_enc, (B, P, E), jnp.float32)
    decoder_hidden = jax.random.normal(k_dec, (B, D), jnp.float32)
    params = init_params(k_par, E, D, A)

    awe, alpha = attention_pallas(encoder_out, decoder_hidden, params)
    awe = jax.block_until_ready(awe)
    alpha = jax.block_until_ready(alpha)

    awe_ref, alpha_ref = attention_reference(encoder_out, decoder_hidden, params)
    assert awe.shape == (B, E) and alpha.shape == (B, P)
    assert jnp.allclose(awe, awe_ref, atol=1e-4, rtol=1e-4)
    assert jnp.allclose(alpha, alpha_ref, atol=1e-4, rtol=1e-4)
    assert jnp.allclose(jnp.sum(alpha, axis=1), 1.0, atol=1e-4)

    print("KERNEL_OK")
</pallas_src>

<mosaic_0001>
module attributes {stable_mosaic.version = 11 : i64} {
  func.func @_attention_kernel(%arg0: i32, %arg1: memref<2x16x32xf32, #tpu.memory_space<vmem>>, %arg2: memref<2x32xf32, #tpu.memory_space<vmem>>, %arg3: memref<32x32xf32, #tpu.memory_space<vmem>>, %arg4: memref<1x32xf32, #tpu.memory_space<vmem>>, %arg5: memref<2x32xf32, #tpu.memory_space<vmem>>, %arg6: memref<2x16xf32, #tpu.memory_space<vmem>>) attributes {dimension_semantics = [#tpu.dimension_semantics<parallel>], iteration_bounds = array<i64: 1>, scalar_prefetch = 0 : i64, scratch_operands = 0 : i64, tpu.core_type = #tpu.core_type<tc>, window_params = [{transform_indices = @transform_0, window_bounds = array<i64: 2, 16, 32>}, {transform_indices = @transform_1, window_bounds = array<i64: 2, 32>}, {pipeline_mode = #tpu.pipeline_mode<synchronous>, transform_indices = @transform_2, window_bounds = array<i64: 32, 32>}, {pipeline_mode = #tpu.pipeline_mode<synchronous>, transform_indices = @transform_3, window_bounds = array<i64: 1, 32>}, {transform_indices = @transform_4, window_bounds = array<i64: 2, 32>}, {transform_indices = @transform_5, window_bounds = array<i64: 2, 16>}]} {
    %c0 = arith.constant 0 : index
    %c0_0 = arith.constant 0 : index
    %c0_1 = arith.constant 0 : index
    %0 = vector.load %arg1[%c0, %c0_0, %c0_1] : memref<2x16x32xf32, #tpu.memory_space<vmem>>, vector<2x16x32xf32>
    %1 = vector.shape_cast %0 : vector<2x16x32xf32> to vector<32x32xf32>
    %c0_2 = arith.constant 0 : index
    %c0_3 = arith.constant 0 : index
    %2 = vector.load %arg3[%c0_2, %c0_3] : memref<32x32xf32, #tpu.memory_space<vmem>>, vector<32x32xf32>
    %cst = arith.constant dense<0.000000e+00> : vector<32x32xf32>
    %3 = tpu.matmul %1, %2, %cst {dimension_numbers = #tpu.dot_dimension_numbers<[1], [0], [0], [1], [0, 0, 1, 1], [], []>} : vector<32x32xf32>, vector<32x32xf32>, vector<32x32xf32> -> vector<32x32xf32>
    %4 = vector.shape_cast %3 : vector<32x32xf32> to vector<2x16x32xf32>
    %c0_4 = arith.constant 0 : index
    %c0_5 = arith.constant 0 : index
    %5 = vector.load %arg2[%c0_4, %c0_5] : memref<2x32xf32, #tpu.memory_space<vmem>>, vector<2x32xf32>
    %6 = vector.shape_cast %5 : vector<2x32xf32> to vector<2x1x32xf32>
    %7 = vector.broadcast %6 : vector<2x1x32xf32> to vector<2x16x32xf32>
    %8 = arith.addf %4, %7 : vector<2x16x32xf32>
    %9 = math.tanh %8 : vector<2x16x32xf32>
    %c0_6 = arith.constant 0 : index
    %c0_7 = arith.constant 0 : index
    %10 = vector.load %arg4[%c0_6, %c0_7] : memref<1x32xf32, #tpu.memory_space<vmem>>, vector<1x32xf32>
    %11 = vector.shape_cast %10 : vector<1x32xf32> to vector<1x1x32xf32>
    %12 = vector.broadcast %11 : vector<1x1x32xf32> to vector<2x16x32xf32>
    %13 = arith.mulf %9, %12 : vector<2x16x32xf32>
    %cst_8 = arith.constant dense<0.000000e+00> : vector<2x16xf32>
    %14 = vector.multi_reduction <add>, %13, %cst_8 [2] : vector<2x16x32xf32> to vector<2x16xf32>
    %cst_9 = arith.constant dense<0xFF800000> : vector<2xf32>
    %15 = vector.multi_reduction <maximumf>, %14, %cst_9 [1] : vector<2x16xf32> to vector<2xf32>
    %16 = vector.shape_cast %15 : vector<2xf32> to vector<2x1xf32>
    %17 = vector.broadcast %16 : vector<2x1xf32> to vector<2x16xf32>
    %18 = arith.subf %14, %17 : vector<2x16xf32>
    %19 = math.exp %18 : vector<2x16xf32>
    %cst_10 = arith.constant dense<0.000000e+00> : vector<2xf32>
    %20 = vector.multi_reduction <add>, %19, %cst_10 [1] : vector<2x16xf32> to vector<2xf32>
    %21 = vector.shape_cast %20 : vector<2xf32> to vector<2x1xf32>
    %22 = tpu.reciprocal %21 {approx = true} : vector<2x1xf32> -> vector<2x1xf32>
    %23 = arith.mulf %21, %22 : vector<2x1xf32>
    %cst_11 = arith.constant 2.000000e+00 : f32
    %24 = vector.broadcast %cst_11 : f32 to vector<2x1xf32>
    %25 = arith.subf %24, %23 : vector<2x1xf32>
    %26 = arith.mulf %22, %25 : vector<2x1xf32>
    %27 = vector.broadcast %26 : vector<2x1xf32> to vector<2x16xf32>
    %28 = arith.mulf %19, %27 : vector<2x16xf32>
    %29 = vector.shape_cast %28 : vector<2x16xf32> to vector<2x16x1xf32>
    %30 = vector.broadcast %29 : vector<2x16x1xf32> to vector<2x16x32xf32>
    %31 = arith.mulf %0, %30 : vector<2x16x32xf32>
    %cst_12 = arith.constant dense<0.000000e+00> : vector<2x32xf32>
    %32 = vector.multi_reduction <add>, %31, %cst_12 [1] : vector<2x16x32xf32> to vector<2x32xf32>
    %c0_13 = arith.constant 0 : index
    %c0_14 = arith.constant 0 : index
    %33 = vector.load %arg5[%c0_13, %c0_14] : memref<2x32xf32, #tpu.memory_space<vmem>>, vector<2x32xf32>
    tpu.vector_store %arg5[%c0_13, %c0_14], %32 {strides = array<i32>} : memref<2x32xf32, #tpu.memory_space<vmem>>, vector<2x32xf32>,
    %c0_15 = arith.constant 0 : index
    %c0_16 = arith.constant 0 : index
    %34 = vector.load %arg6[%c0_15, %c0_16] : memref<2x16xf32, #tpu.memory_space<vmem>>, vector<2x16xf32>
    tpu.vector_store %arg6[%c0_15, %c0_16], %28 {strides = array<i32>} : memref<2x16xf32, #tpu.memory_space<vmem>>, vector<2x16xf32>,
    return
  }
  func.func @transform_0(%arg0: i32) -> (i32, i32, i32) {
    %c0_i32 = arith.constant 0 : i32
    %c0_i32_0 = arith.constant 0 : i32
    %c0_i32_1 = arith.constant 0 : i32
    return %arg0, %c0_i32, %c0_i32_0 : i32, i32, i32
  }
  func.func @transform_1(%arg0: i32) -> (i32, i32) {
    %c0_i32 = arith.constant 0 : i32
    %c0_i32_0 = arith.constant 0 : i32
    return %arg0, %c0_i32 : i32, i32
  }
  func.func @transform_2(%arg0: i32) -> (i32, i32) {
    %c0_i32 = arith.constant 0 : i32
    %c0_i32_0 = arith.constant 0 : i32
    %c0_i32_1 = arith.constant 0 : i32
    return %c0_i32, %c0_i32_0 : i32, i32
  }
  func.func @transform_3(%arg0: i32) -> (i32, i32) {
    %c0_i32 = arith.constant 0 : i32
    %c0_i32_0 = arith.constant 0 : i32
    %c0_i32_1 = arith.constant 0 : i32
    return %c0_i32, %c0_i32_0 : i32, i32
  }
  func.func @transform_4(%arg0: i32) -> (i32, i32) {
    %c0_i32 = arith.constant 0 : i32
    %c0_i32_0 = arith.constant 0 : i32
    return %arg0, %c0_i32 : i32, i32
  }
  func.func @transform_5(%arg0: i32) -> (i32, i32) {
    %c0_i32 = arith.constant 0 : i32
    %c0_i32_0 = arith.constant 0 : i32
    return %arg0, %c0_i32 : i32, i32
  }
}

</mosaic_0001>

<llo_original>
// kernel: tpu_custom_call.1
$region0: #{tpu_custom_call.1}
  #allocation0 [shape = 'u32[]', space=smem, size = 0x4, offset = 0x4, fixed_abs, tag = 'smem constant byte address 0x4 - core index']
  #allocation1 [shape = 'u32[144,128]{1,0:T(1,128)}', space=vmem, size = 0x12000, scoped, tag = 'internal scratch']
  %s0 = inlined_call_operand.hbm [shape: f32[2,16,32], index: 0, kind: input, shape index: {}]
  %s1 = inlined_call_operand.vmem [shape: f32[2,32], index: 1, kind: input, shape index: {}]
  %s2 = inlined_call_operand.hbm [shape: f32[32,32], index: 2, kind: input, shape index: {}]
  %s3 = inlined_call_operand.vmem [shape: f32[1,32], index: 3, kind: input, shape index: {}]
  %s4 = inlined_call_operand.hbm [shape: f32[2,32], index: 4, kind: output, shape index: {0}]
  %s5 = inlined_call_operand.hbm [shape: f32[2,16], index: 5, kind: output, shape index: {1}]
  %6 = xla_tuple %s4, %s5
  %s7 = sld [smem:[#allocation0]]
  $region42: #{tpu_custom_call.1} parent=0
    _
  %s9 = ssub.s32 1, %s7
  %s10 = scalar_select 0, %s9, %s7
  $region1: #{tpu_custom_call.1} parent=0
    #allocation2 [shape = 'u8[16384]{0}', space=vmem, size = 0x4000, scoped, tag = 'input window, operand 0, single buffered']
    #allocation3 [shape = 's32[1]{0}', space=sflag, size = 0x4, scoped, tag = 'scoped memory for tpu_custom_call.1']
    #allocation4 [shape = 's32[1]{0}', space=sflag, size = 0x4, scoped, tag = 'scoped memory for tpu_custom_call.1']
    #allocation5 [shape = 'u8[16384]{0}', space=vmem, size = 0x4000, scoped, tag = 'input window, operand 2, single buffered']
    #allocation6 [shape = 's32[1]{0}', space=sflag, size = 0x4, scoped, tag = 'scoped memory for tpu_custom_call.1']
    #allocation7 [shape = 'u8[1024]{0}', space=vmem, size = 0x400, scoped, tag = 'output window, operand 0, single buffered']
    #allocation8 [shape = 'u8[1024]{0}', space=vmem, size = 0x400, scoped, tag = 'output window, operand 1, single buffered']
    #allocation9 [shape = 's32[1]{0}', space=sflag, size = 0x4, scoped, tag = 'scoped memory for tpu_custom_call.1']
    %11 = vsyncpa [#allocation3], 0
    %12 = vsyncpa [#allocation6], 0
    %13 = vsyncpa [#allocation4], 0
    %14 = vsyncpa [#allocation9], 0
    // Predicated region
    $region2: #{tpu_custom_call.1} parent=1 // pred_check
      _
    $region3: #{tpu_custom_call.1} parent=1 // pred_check_branch
      %16 = sbr.rel (0) target = $region5
    $region4: #{tpu_custom_call.1} parent=1 // pred_region
      %s18 = ssub.s32 512, 512
      %19 = vsyncadd [#allocation3], %s18
      %s20 = sshll.u32 [#allocation2], 4
      %s21 = int_to_ptr.vmem [resolvable:$true] %s20
      %26 = dma.hbm_to_vmem [thread:$0]  %s0, 512, %s21, [#allocation3], 128, 128, 8
    $region5: #{tpu_custom_call.1} parent=1 // pred_fallthru
      _
    // Predicated region
    $region6: #{tpu_custom_call.1} parent=1 // pred_check
      _
    $region7: #{tpu_custom_call.1} parent=1 // pred_check_branch
      %28 = sbr.rel (0) target = $region9
    $region8: #{tpu_custom_call.1} parent=1 // pred_region
      _
    $region9: #{tpu_custom_call.1} parent=1 // pred_fallthru
      _
    // Predicated region
    $region10: #{tpu_custom_call.1} parent=1 // pred_check
      _
    $region11: #{tpu_custom_call.1} parent=1 // pred_check_branch
      %30 = sbr.rel (0) target = $region13
    $region12: #{tpu_custom_call.1} parent=1 // pred_region
      %s32 = ssub.s32 512, 512
      %33 = vsyncadd [#allocation6], %s32
      %s34 = sshll.u32 [#allocation5], 4
      %s35 = int_to_ptr.vmem [resolvable:$true] %s34
      %40 = dma.hbm_to_vmem [thread:$0]  %s2, 512, %s35, [#allocation6], 128, 128, 8
    $region13: #{tpu_custom_call.1} parent=1 // pred_fallthru
      _
    // Predicated region
    $region14: #{tpu_custom_call.1} parent=1 // pred_check
      _
    $region15: #{tpu_custom_call.1} parent=1 // pred_check_branch
      %42 = sbr.rel (0) target = $region17
    $region16: #{tpu_custom_call.1} parent=1 // pred_region
      _
    $region17: #{tpu_custom_call.1} parent=1 // pred_fallthru
      _
    // Predicated region
    $region18: #{tpu_custom_call.1} parent=1 // pred_check
      _
    $region19: #{tpu_custom_call.1} parent=1 // pred_check_branch
      %44 = sbr.rel (0) target = $region21
    $region20: #{tpu_custom_call.1} parent=1 // pred_region
      %45 = dma.done [#allocation3], 512
    $region21: #{tpu_custom_call.1} parent=1 // pred_fallthru
      _
    // Predicated region
    $region22: #{tpu_custom_call.1} parent=1 // pred_check
      _
    $region23: #{tpu_custom_call.1} parent=1 // pred_check_branch
      %47 = sbr.rel (0) target = $region25
    $region24: #{tpu_custom_call.1} parent=1 // pred_region
      %48 = dma.done [#allocation6], 512
    $region25: #{tpu_custom_call.1} parent=1 // pred_fallthru
      _
    %v49 = vld [vmem:[#allocation2] sm:$0xff]
    %v50 = vld [vmem:[#allocation2 + $0x8] sm:$0xff]
    %v51 = vld [vmem:[#allocation2 + $0x10] sm:$0xff]
    %v52 = vld [vmem:[#allocation2 + $0x18] sm:$0xff]
    %v53 = vld [vmem:[#allocation5] sm:$0xff]
    %v54 = vld [vmem:[#allocation5 + $0x8] sm:$0xff]
    %v55 = vld [vmem:[#allocation5 + $0x10] sm:$0xff]
    %v56 = vld [vmem:[#allocation5 + $0x18] sm:$0xff]
    %vm57 = vcmask 261120
    %v59 = vsel %vm57, %v49, 0
    %v62 = vsel %vm57, %v50, 0
    %v65 = vsel %vm57, %v51, 0
    %v68 = vsel %vm57, %v52, 0
    %70 = vmatprep.subr.mxu0 0.0
    %71 = vmatpush1.msra.mxu0 %v53
    %72 = vmatprep.subr.mxu0 0.0
    %73 = vmatpush1.msra.mxu0 %v54
    %74 = vmatprep.subr.mxu0 0.0
    %75 = vmatpush1.msra.mxu0 %v55
    %76 = vmatprep.subr.mxu0 0.0
    %77 = vmatpush1.msra.mxu0 %v56
    %78 = vmatprep.subr.mxu0 0.0
    %79 = vmatpush1.msra.mxu0 0.0
    %80 = vmatprep.subr.mxu0 0.0
    %81 = vmatpush1.msra.mxu0 0.0
    %82 = vmatprep.subr.mxu0 0.0
    %83 = vmatpush1.msra.mxu0 0.0
    %84 = vmatprep.subr.mxu0 0.0
    %85 = vmatpush1.msra.mxu0 0.0
    %86 = vmatprep.subr.mxu0 0.0
    %87 = vmatpush1.msra.mxu0 0.0
    %88 = vmatprep.subr.mxu0 0.0
    %89 = vmatpush1.msra.mxu0 0.0
    %90 = vmatprep.subr.mxu0 0.0
    %91 = vmatpush1.msra.mxu0 0.0
    %92 = vmatprep.subr.mxu0 0.0
    %93 = vmatpush1.msra.mxu0 0.0
    %94 = vmatprep.subr.mxu0 0.0
    %95 = vmatpush1.msra.mxu0 0.0
    %96 = vmatprep.subr.mxu0 0.0
    %97 = vmatpush1.msra.mxu0 0.0
    %98 = vmatprep.subr.mxu0 0.0
    %99 = vmatpush1.msra.mxu0 0.0
    %100 = vmatprep.subr.mxu0 0.0
    %101 = vmatpush1.msra.mxu0 0.0
    %102 = vmatprep.subr.mxu0 0.0
    %103 = vmatpush1.msra.mxu0 0.0
    %104 = vmatprep.subr.mxu0 0.0
    %105 = vmatpush1.msra.mxu0 0.0
    %106 = vmatprep.subr.mxu0 0.0
    %107 = vmatpush1.msra.mxu0 0.0
    %108 = vmatprep.subr.mxu0 0.0
    %109 = vmatpush1.msra.mxu0 0.0
    %110 = vmatprep.subr.mxu0 0.0
    %111 = vmatpush1.msra.mxu0 0.0
    %112 = vmatprep.subr.mxu0 0.0
    %113 = vmatpush1.msra.mxu0 0.0
    %114 = vmatprep.subr.mxu0 0.0
    %115 = vmatpush1.msra.mxu0 0.0
    %116 = vmatprep.subr.mxu0 0.0
    %117 = vmatpush1.msra.mxu0 0.0
    %118 = vmatprep.subr.mxu0 0.0
    %119 = vmatpush1.msra.mxu0 0.0
    %120 = vmatprep.subr.mxu0 0.0
    %121 = vmatpush1.msra.mxu0 0.0
    %122 = vmatprep.subr.mxu0 0.0
    %123 = vmatpush1.msra.mxu0 0.0
    %124 = vmatprep.subr.mxu0 0.0
    %125 = vmatpush1.msra.mxu0 0.0
    %126 = vmatprep.subr.mxu0 0.0
    %127 = vmatpush1.msra.mxu0 0.0
    %128 = vmatprep.subr.mxu0 0.0
    %129 = vmatpush1.msra.mxu0 0.0
    %130 = vmatprep.subr.mxu0 0.0
    %131 = vmatpush1.msra.mxu0 0.0
    %132 = vmatprep.subr.mxu0 0.0
    %133 = vmatpush1.msra.mxu0 0.0
    %134 = vmatprep.mubr.f32.mxu0 0.0
    %135 = vmatmul.mubr.f32.gmra.mrb[0].mxu0 %v59
    %v136 = vpop.f32.mrb[0].mxu0
    %v137 = vadd.f32 0.0, %v136
    %v138 = vpop.f32.mrb[0].mxu0
    %139 = vmatprep.mubr.f32.mxu0 0.0
    %140 = vmatmul.mubr.f32.gmra.mrb[0].mxu0 %v62
    %v141 = vpop.f32.mrb[0].mxu0
    %v142 = vadd.f32 0.0, %v141
    %v143 = vpop.f32.mrb[0].mxu0
    %144 = vmatprep.mubr.f32.mxu0 0.0
    %145 = vmatmul.mubr.f32.gmra.mrb[0].mxu0 %v65
    %v146 = vpop.f32.mrb[0].mxu0
    %v147 = vadd.f32 0.0, %v146
    %v148 = vpop.f32.mrb[0].mxu0
    %149 = vmatprep.mubr.f32.mxu0 0.0
    %150 = vmatmul.mubr.f32.gmra.mrb[0].mxu0 %v68
    %v151 = vpop.f32.mrb[0].mxu0
    %v152 = vadd.f32 0.0, %v151
    %v153 = vpop.f32.mrb[0].mxu0
    %154 = vdwg.mxu0
    %v155 = vld [vmem:[%s1] sm:$0x3]
    %v158 = vunpack.c.l.s4 1966171168
    %v159 = vunpack.c.0.s8 %v158
    %v160 = vlaneseq
    %v161 = vshrl.u32 %v160, 7
    %v162 = vsub.s32 %v159, %v161
    %v163 = vrot.slane %v155, %v162
    %v164 = vcombine.high %v163, %v163
    %v166 = vunpack.c.l.s4 1966171168
    %v167 = vunpack.c.0.s8 %v166
    %v168 = vlaneseq
    %v169 = vshrl.u32 %v168, 7
    %v170 = vsub.s32 %v167, %v169
    %v171 = vrot.slane %v163, %v170
    %v173 = vunpack.c.l.s4 1966171168
    %v174 = vunpack.c.0.s8 %v173
    %v175 = vlaneseq
    %v176 = vshrl.u32 %v175, 7
    %v177 = vsub.s32 %v174, %v176
    %v178 = vrot.slane %v164, %v177
    %v179 = vlaneseq
    %v180 = vshrl.u32 %v179, 7
    %v181 = vsub.s32 0, %v180
    %v182 = vrot.slane %v171, %v181
    %v183 = vlaneseq
    %v184 = vshrl.u32 %v183, 7
    %v185 = vsub.s32 0, %v184
    %v186 = vrot.slane %v178, %v185
    %v189 = vadd.f32 %v137, %v182
    %v190 = vadd.f32 %v142, %v182
    %v191 = vadd.f32 %v147, %v186
    %v192 = vadd.f32 %v152, %v186
    %v193 = vtanh.pop %v189
    %v194 = vtanh.pop %v190
    %v195 = vtanh.pop %v191
    %v196 = vtanh.pop %v192
    %v197 = vld [vmem:[%s3] sm:$0x1]
    %v199 = vlaneseq
    %v200 = vshrl.u32 %v199, 7
    %v201 = vsub.s32 0, %v200
    %v202 = vrot.slane %v197, %v201
    %v204 = vmul.f32 %v193, %v202
    %v205 = vmul.f32 %v194, %v202
    %v206 = vmul.f32 %v195, %v202
    %v207 = vmul.f32 %v196, %v202
    %v208 = vsel %vm57, %v204, 0.0
    %209 = vadd.xlane.f32.xlu0 %v208
    %v210 = vpop.xlane.xlu0 %209
    %v211 = vsel %vm57, %v205, 0.0
    %212 = vadd.xlane.f32.xlu0 %v211
    %v213 = vpop.xlane.xlu0 %212
    %v214 = vsel %vm57, %v206, 0.0
    %215 = vadd.xlane.f32.xlu0 %v214
    %v216 = vpop.xlane.xlu0 %215
    %v217 = vsel %vm57, %v207, 0.0
    %218 = vadd.xlane.f32.xlu0 %v217
    %v219 = vpop.xlane.xlu0 %218
    %v224 = vlaneseq
    %v225 = vand.u32 %v224, 127
    %v226 = vlaneseq
    %v227 = vshrl.u32 %v226, 7
    %v228 = vsub.s32 %v225, %v227
    %v229 = vrot.slane %v210, %v228
    %v230 = vadd.s32 %v225, 4294967288
    %v231 = vlaneseq
    %v232 = vshrl.u32 %v231, 7
    %v233 = vsub.s32 %v230, %v232
    %v234 = vrot.slane %v213, %v233
    %vm235 = vcmask 130112
    %v236 = vsel %vm235, %v234, %v229
    %v237 = vlaneseq
    %v238 = vshrl.u32 %v237, 7
    %v239 = vsub.s32 %v225, %v238
    %v240 = vrot.slane %v216, %v239
    %v241 = vlaneseq
    %v242 = vshrl.u32 %v241, 7
    %v243 = vsub.s32 %v230, %v242
    %v244 = vrot.slane %v219, %v243
    %v245 = vsel %vm235, %v244, %v240
    %vm246 = vcmask 1041409
    %v247 = vsel %vm246, %v245, %v236
    %vm249 = vcmask 123904
    %v250 = vsel %vm249, %v247, -inf
    %251 = vmax.xlane.f32.xlu0 %v250
    %v252 = vpop.xlane.xlu0 %251
    %v254 = vlaneseq
    %v255 = vshrl.u32 %v254, 7
    %v256 = vsub.s32 0, %v255
    %v257 = vrot.slane %v252, %v256
    %v258 = vlaneseq
    %v259 = vshrl.u32 %v258, 7
    %v260 = vsub.s32 1, %v259
    %v261 = vrot.slane %v252, %v260
    %v264 = vsub.f32 %v210, %v257
    %v265 = vsub.f32 %v213, %v257
    %v266 = vsub.f32 %v216, %v261
    %v267 = vsub.f32 %v219, %v261
    %v268 = vmul.f32 %v264, 1.442695
    %v269 = vpow.pop %v268
    %v270 = vmul.f32 %v265, 1.442695
    %v271 = vpow.pop %v270
    %v272 = vmul.f32 %v266, 1.442695
    %v273 = vpow.pop %v272
    %v274 = vmul.f32 %v267, 1.442695
    %v275 = vpow.pop %v274
    %280 = vset.pattern.permute.xlu0 0
    %281 = vperm.xlu0 %280, %v269
    %v282 = vpop.permute.xlu0 %281
    %283 = vset.pattern.permute.xlu0 0
    %284 = vperm.xlu0 %283, %v271
    %v285 = vpop.permute.xlu0 %284
    %286 = vset.pattern.permute.xlu0 0
    %287 = vperm.xlu0 %286, %v273
    %v288 = vpop.permute.xlu0 %287
    %289 = vset.pattern.permute.xlu0 0
    %290 = vperm.xlu0 %289, %v275
    %v291 = vpop.permute.xlu0 %290
    %v292 = vlaneseq
    %v293 = vshrl.u32 %v292, 7
    %v294 = vsub.s32 %v225, %v293
    %v295 = vrot.slane %v282, %v294
    %v296 = vlaneseq
    %v297 = vshrl.u32 %v296, 7
    %v298 = vsub.s32 %v230, %v297
    %v299 = vrot.slane %v285, %v298
    %v300 = vsel %vm235, %v299, %v295
    %v301 = vlaneseq
    %v302 = vshrl.u32 %v301, 7
    %v303 = vsub.s32 %v225, %v302
    %v304 = vrot.slane %v288, %v303
    %v305 = vlaneseq
    %v306 = vshrl.u32 %v305, 7
    %v307 = vsub.s32 %v230, %v306
    %v308 = vrot.slane %v291, %v307
    %v309 = vsel %vm235, %v308, %v304
    %v310 = vsel %vm246, %v309, %v300
    %v312 = vsel %vm249, %v310, 0.0
    %313 = vadd.xlane.f32.xlu0 %v312
    %v314 = vpop.xlane.xlu0 %313
    %v315 = vrcp.pop %v314
    %v316 = vmul.f32 %v314, %v315
    %v317 = vsub.f32 2.0, %v316
    %v318 = vmul.f32 %v315, %v317
    %v320 = vlaneseq
    %v321 = vshrl.u32 %v320, 7
    %v322 = vsub.s32 0, %v321
    %v323 = vrot.slane %v318, %v322
    %v324 = vlaneseq
    %v325 = vshrl.u32 %v324, 7
    %v326 = vsub.s32 1, %v325
    %v327 = vrot.slane %v318, %v326
    %v330 = vmul.f32 %v269, %v323
    %v331 = vmul.f32 %v271, %v323
    %v332 = vmul.f32 %v273, %v327
    %v333 = vmul.f32 %v275, %v327
    %335 = vset.pattern.permute.xlu0 0
    %336 = vperm.xlu0 %335, %v330
    %v337 = vpop.permute.xlu0 %336
    %340 = vset.pattern.permute.xlu0 0
    %341 = vperm.xlu0 %340, %v331
    %v342 = vpop.permute.xlu0 %341
    %345 = vset.pattern.permute.xlu0 0
    %346 = vperm.xlu0 %345, %v332
    %v347 = vpop.permute.xlu0 %346
    %350 = vset.pattern.permute.xlu0 0
    %351 = vperm.xlu0 %350, %v333
    %v352 = vpop.permute.xlu0 %351
    %v354 = vmul.f32 %v49, %v337
    %v355 = vmul.f32 %v50, %v342
    %v356 = vmul.f32 %v51, %v347
    %v357 = vmul.f32 %v52, %v352
    %v358 = vsel %vm57, %v354, 0.0
    %v359 = vsel %vm57, %v355, 0.0
    %v360 = vadd.f32 %v358, %v359
    %v361 = vrot.slane %v360, 4
    %v362 = vadd.f32 %v360, %v361
    %v363 = vrot.slane %v362, 2
    %v364 = vadd.f32 %v362, %v363
    %v365 = vrot.slane %v364, 1
    %v366 = vadd.f32 %v364, %v365
    %v367 = vsel %vm57, %v356, 0.0
    %v368 = vsel %vm57, %v357, 0.0
    %v369 = vadd.f32 %v367, %v368
    %v370 = vrot.slane %v369, 4
    %v371 = vadd.f32 %v369, %v370
    %v372 = vrot.slane %v371, 2
    %v373 = vadd.f32 %v371, %v372
    %v374 = vrot.slane %v373, 1
    %v375 = vadd.f32 %v373, %v374
    %v378 = vsel %vm246, %v375, %v366
    %vm380 = vcmask 254976
    %381 = vst.msk [vmem:[#allocation7] sm:$0x3] %vm380, %v378
    %v382 = vlaneseq
    %v383 = vshrl.u32 %v382, 7
    %v384 = vsub.s32 %v225, %v383
    %v385 = vrot.slane %v337, %v384
    %v386 = vlaneseq
    %v387 = vshrl.u32 %v386, 7
    %v388 = vsub.s32 %v230, %v387
    %v389 = vrot.slane %v342, %v388
    %v390 = vsel %vm235, %v389, %v385
    %v391 = vlaneseq
    %v392 = vshrl.u32 %v391, 7
    %v393 = vsub.s32 %v225, %v392
    %v394 = vrot.slane %v347, %v393
    %v395 = vlaneseq
    %v396 = vshrl.u32 %v395, 7
    %v397 = vsub.s32 %v230, %v396
    %v398 = vrot.slane %v352, %v397
    %v399 = vsel %vm235, %v398, %v394
    %v400 = vsel %vm246, %v399, %v390
    %402 = vst.msk [vmem:[#allocation8] sm:$0x3] %vm249, %v400
    // Predicated region
    $region26: #{tpu_custom_call.1} parent=1 // pred_check
      _
    $region27: #{tpu_custom_call.1} parent=1 // pred_check_branch
      %404 = sbr.rel (0) target = $region29
    $region28: #{tpu_custom_call.1} parent=1 // pred_region
      %s406 = ssub.s32 32, 32
      %407 = vsyncadd [#allocation4], %s406
      %s409 = sshll.u32 [#allocation7], 4
      %s410 = int_to_ptr.vmem [resolvable:$true] %s409
      %412 = dma.vmem_to_hbm [thread:$0]  %s410, 32, %s4, [#allocation4]
    $region29: #{tpu_custom_call.1} parent=1 // pred_fallthru
      _
    // Predicated region
    $region30: #{tpu_custom_call.1} parent=1 // pred_check
      _
    $region31: #{tpu_custom_call.1} parent=1 // pred_check_branch
      %414 = sbr.rel (0) target = $region33
    $region32: #{tpu_custom_call.1} parent=1 // pred_region
      %s416 = ssub.s32 32, 32
      %417 = vsyncadd [#allocation9], %s416
      %s419 = sshll.u32 [#allocation8], 4
      %s420 = int_to_ptr.vmem [resolvable:$true] %s419
      %422 = dma.vmem_to_hbm [thread:$0]  %s420, 32, %s5, [#allocation9]
    $region33: #{tpu_custom_call.1} parent=1 // pred_fallthru
      _
    // Predicated region
    $region34: #{tpu_custom_call.1} parent=1 // pred_check
      _
    $region35: #{tpu_custom_call.1} parent=1 // pred_check_branch
      %424 = sbr.rel (0) target = $region37
    $region36: #{tpu_custom_call.1} parent=1 // pred_region
      %425 = dma.done [#allocation4], 32
    $region37: #{tpu_custom_call.1} parent=1 // pred_fallthru
      _
    // Predicated region
    $region38: #{tpu_custom_call.1} parent=1 // pred_check
      _
    $region39: #{tpu_custom_call.1} parent=1 // pred_check_branch
      %427 = sbr.rel (0) target = $region41
    $region40: #{tpu_custom_call.1} parent=1 // pred_region
      %428 = dma.done [#allocation9], 32
    $region41: #{tpu_custom_call.1} parent=1 // pred_fallthru
      _
    %429 = vsyncpa [#allocation3], 1
    %430 = vsyncpa [#allocation6], 1
    %431 = vsyncpa [#allocation4], 1
    %432 = vsyncpa [#allocation9], 1

</llo_original>
